<compile_context>
chip_gen: v6e
topology: v6e:2x2x1
jax: 0.10.0
libtpu: 0.0.40
codegen_flags: <defaults>
</compile_context>

<pallas_src>
import math
import numpy as np
import jax
import jax.numpy as jnp
from jax.experimental import pallas as pl
from jax.experimental.pallas import tpu as pltpu


# ----------------------------- modulator bases (init-time glue, numpy) ---------------

def legendre_functions(window_len, degree, zero_order=True):
    """LegendreModulator.functions: scaled Legendre polys on [-1, 1], shape (W, degree+zero_order)."""
    t = np.linspace(-1.0, 1.0, window_len)
    polys = [np.ones_like(t), t]
    for n in range(1, degree):
        polys.append(((2 * n + 1) * t * polys[n] - n * polys[n - 1]) / (n + 1))
    P = np.stack(polys[: degree + 1], axis=-1)
    P = P / np.abs(P).max(axis=0, keepdims=True)  # scale=True
    if not zero_order:
        P = P[:, 1:]
    return P.astype(np.float32)


def fourier_functions(window_len, num_freqs, dt=1.0):
    """FourierModulator.functions: sin(2*pi*f*t + phase), phases zero, freqs spread in (0, 1/(2dt)]."""
    t = np.arange(window_len, dtype=np.float32) * dt
    freqs = np.linspace(1.0 / (window_len * dt), 1.0 / (2.0 * dt), num_freqs, dtype=np.float32)
    phases = np.zeros((num_freqs,), dtype=np.float32)
    return np.sin(2.0 * np.pi * t[:, None] * freqs[None, :] + phases[None, :]).astype(np.float32)


# ----------------------------- Pallas kernel (hot path) ------------------------------

def modulation_kernel(xT_ref, w_ref, fselT_ref, fbT_ref, oT_ref):
    # xT_ref   : (C, TB)   flattened (batch*seq) rows on lanes, input features on sublanes
    # w_ref    : (M, C)    linear weight (resident, constant index_map)
    # fselT_ref: (M, TB)   F[steps] tiled to one row-tile period, resident across the grid
    # fbT_ref  : (M, TB)   F[steps] * bias (folded), resident across the grid
    # oT_ref   : (M, TB)   modulated output, transposed (lane-dense in the row axis)
    w = w_ref[...].astype(jnp.float32)
    C = xT_ref.shape[0]

    # y^T = W @ x^T as C unrolled VPU FMAs (4x6 contraction: skip the MXU entirely).
    # Slice the ref per feature row (no whole-block materialize-then-slice); f32 accum.
    acc = w[:, 0:1] * xT_ref[0:1, :].astype(jnp.float32)
    for c in range(1, C):
        acc = acc + w[:, c:c + 1] * xT_ref[c:c + 1, :].astype(jnp.float32)

    # modulation multiply with folded bias: out^T = fsel^T * y^T + (fsel*b)^T (single FMA)
    oT_ref[...] = (fselT_ref[...].astype(jnp.float32) * acc
                   + fbT_ref[...].astype(jnp.float32)).astype(oT_ref.dtype)


def _pick_row_tile(R, S, max_tb=32768):
    """Pick the row tile TB.

    Constraints / preferences:
      * TB % lcm(S, 128) == 0  -> lane-dense stores AND phase-aligned resident modulation tile
      * TB divides R, TB <= max_tb (worst-case VMEM ~256*TB bytes; 32K -> ~8 MiB, fits the
        16 MiB scoped default on v5e without touching vmem_limit_bytes)
      * prefer an even grid length >= 2 (v7x shards the parallel axis over 2 TensorCores)
      * fall back to a single full-extent block for small / non-divisible R.
    """
    base = (S * 128) // math.gcd(S, 128)       # lcm(S, 128)
    best_even, best_any = None, None
    k = min(max_tb, R) // base
    while k >= 1:
        tb = k * base
        if R % tb == 0 and R // tb >= 2:
            if best_any is None:
                best_any = tb
            if (R // tb) % 2 == 0 and best_even is None:
                best_even = tb
            if best_even is not None:
                break
        k -= 1
    if best_even is not None and (best_any is None or 2 * best_even >= best_any):
        return best_even
    if best_any is not None:
        return best_any
    return R   # single full-extent block (grid of 1); TB = R = N*S is a multiple of S


def modulation_forward(x, F, steps, weight, bias):
    """x: (N, S, C) f32; F: (window_len, M); steps: (S,) int; weight: (M, C); bias: (M,)."""
    N, S, C = x.shape
    M = F.shape[-1]
    R = N * S

    TB = _pick_row_tile(R, S)
    grid = (R // TB,)

    # The modulation pattern repeats every S rows of the flattened row axis, so a single
    # (M, TB) tile (TB % S == 0) covers every grid step; it stays VMEM-resident below.
    # TODO(synk): `steps` is gathered into F with XLA gather semantics (no bounds check).
    f_sel = F[steps]                                   # (S, M) modulation-basis gather
    reps = TB // S                                     # TB % S == 0 by construction
    fsel_tile = jnp.tile(f_sel, (reps, 1))             # (TB, M) one row-tile period
    fb_tile = fsel_tile * bias[None, :]                # (TB, M) bias folded into modulation

    # Layout plumbing (rows -> lanes). Kept in the (jitted) wrapper so XLA can fold the
    # transposes into adjacent ops; do NOT move to (TB, C)/(TB, M) kernel blocks (last-dim
    # 4/6 blocks would force masked partial stores and heavy padding).
    xT = x.reshape(R, C).T                             # (C, R)
    fselT = fsel_tile.T                                # (M, TB)
    fbT = fb_tile.T                                    # (M, TB)

    outT = pl.pallas_call(
        modulation_kernel,
        out_shape=jax.ShapeDtypeStruct((M, R), x.dtype),
        grid=grid,
        in_specs=[
            pl.BlockSpec((C, TB), lambda r: (0, r)),     # streamed: 4 f32 / row
            pl.BlockSpec((M, C), lambda r: (0, 0)),      # resident weight
            pl.BlockSpec((M, TB), lambda r: (0, 0)),     # resident modulation tile
            pl.BlockSpec((M, TB), lambda r: (0, 0)),     # resident folded-bias tile
        ],
        out_specs=pl.BlockSpec((M, TB), lambda r: (0, r)),  # streamed: 6 f32 / row
        compiler_params=pltpu.CompilerParams(dimension_semantics=("parallel",)),
    )(xT, weight, fselT, fbT)

    # back to the module's (N, S, M) output layout
    return outT.T.reshape(N, S, M)


# TODO(synk): norm_type='batch'/'layer' and pure=True (constant-concat) paths are not
# implemented; defaults (norm_type=False, pure=False) make them identity / unused.


# ----------------------------- driver -------------------------------------------------

if __name__ == "__main__":
    # module hyper-params (small, deterministic)
    window_len = 16
    in_features = 4
    legendre_degree = 3
    num_freqs = 2
    dt = 1.0

    # Build F = cat([Legendre, Fourier], -1)  -> (window_len, num_modulators)
    F_np = np.concatenate(
        [
            legendre_functions(window_len, legendre_degree, zero_order=True),
            fourier_functions(window_len, num_freqs, dt=dt),
        ],
        axis=-1,
    )
    F = jnp.asarray(F_np)                      # (16, 6)
    num_modulators = F.shape[-1]

    # Deterministic linear_fn parameters (HiddenLayer: out = x @ W^T + b, identity act)
    key = jax.random.PRNGKey(0)
    k_x, k_w, k_b, k_x2 = jax.random.split(key, 4)
    weight = 0.1 * jax.random.normal(k_w, (num_modulators, in_features), dtype=jnp.float32)
    bias = 0.01 * jax.random.normal(k_b, (num_modulators,), dtype=jnp.float32)

    fwd = jax.jit(modulation_forward)

    def ref_fn(x_, steps_):
        return F[steps_][None, :, :] * (jnp.einsum("nsc,mc->nsm", x_, weight) + bias[None, None, :])

    # Case 1: module-default small shapes (single full-extent block, grid=(1,))
    batch, seq_len = 2, 8
    steps = jnp.arange(seq_len, dtype=jnp.int32)   # modulation step indices into the window
    x1 = jax.random.normal(k_x, (batch, seq_len, in_features), dtype=jnp.float32)
    out1 = jax.block_until_ready(fwd(x1, F, steps, weight, bias))
    assert out1.shape == (batch, seq_len, num_modulators)
    assert np.allclose(np.asarray(out1), np.asarray(ref_fn(x1, steps)), atol=1e-5, rtol=1e-5)

    # Case 2: exercises the tiled path (R=512 -> TB=256, grid=(2,), resident modulation tile)
    batch2 = 64
    x2 = jax.random.normal(k_x2, (batch2, seq_len, in_features), dtype=jnp.float32)
    out2 = jax.block_until_ready(fwd(x2, F, steps, weight, bias))
    assert out2.shape == (batch2, seq_len, num_modulators)
    assert np.allclose(np.asarray(out2), np.asarray(ref_fn(x2, steps)), atol=1e-5, rtol=1e-5)

    print("KERNEL_OK")
</pallas_src>

<mosaic_0001>
module attributes {stable_mosaic.version = 11 : i64} {
  func.func @modulation_kernel(%arg0: i32, %arg1: memref<4x16xf32, #tpu.memory_space<vmem>>, %arg2: memref<6x4xf32, #tpu.memory_space<vmem>>, %arg3: memref<6x16xf32, #tpu.memory_space<vmem>>, %arg4: memref<6x16xf32, #tpu.memory_space<vmem>>, %arg5: memref<6x16xf32, #tpu.memory_space<vmem>>) attributes {dimension_semantics = [#tpu.dimension_semantics<parallel>], iteration_bounds = array<i64: 1>, scalar_prefetch = 0 : i64, scratch_operands = 0 : i64, tpu.core_type = #tpu.core_type<tc>, window_params = [{transform_indices = @transform_0, window_bounds = array<i64: 4, 16>}, {pipeline_mode = #tpu.pipeline_mode<synchronous>, transform_indices = @transform_1, window_bounds = array<i64: 6, 4>}, {pipeline_mode = #tpu.pipeline_mode<synchronous>, transform_indices = @transform_2, window_bounds = array<i64: 6, 16>}, {pipeline_mode = #tpu.pipeline_mode<synchronous>, transform_indices = @transform_3, window_bounds = array<i64: 6, 16>}, {transform_indices = @transform_4, window_bounds = array<i64: 6, 16>}]} {
    %c0 = arith.constant 0 : index
    %c0_0 = arith.constant 0 : index
    %0 = vector.load %arg2[%c0, %c0_0] : memref<6x4xf32, #tpu.memory_space<vmem>>, vector<6x4xf32>
    %1 = vector.extract_strided_slice %0 {offsets = [0, 0], sizes = [6, 1], strides = [1, 1]} : vector<6x4xf32> to vector<6x1xf32>
    %c0_1 = arith.constant 0 : index
    %c0_2 = arith.constant 0 : index
    %2 = vector.load %arg1[%c0_1, %c0_2] : memref<4x16xf32, #tpu.memory_space<vmem>>, vector<1x16xf32>
    %3 = vector.broadcast %1 : vector<6x1xf32> to vector<6x16xf32>
    %4 = vector.broadcast %2 : vector<1x16xf32> to vector<6x16xf32>
    %5 = arith.mulf %3, %4 : vector<6x16xf32>
    %6 = vector.extract_strided_slice %0 {offsets = [0, 1], sizes = [6, 1], strides = [1, 1]} : vector<6x4xf32> to vector<6x1xf32>
    %c1 = arith.constant 1 : index
    %c0_3 = arith.constant 0 : index
    %7 = vector.load %arg1[%c1, %c0_3] : memref<4x16xf32, #tpu.memory_space<vmem>>, vector<1x16xf32>
    %8 = vector.broadcast %6 : vector<6x1xf32> to vector<6x16xf32>
    %9 = vector.broadcast %7 : vector<1x16xf32> to vector<6x16xf32>
    %10 = arith.mulf %8, %9 : vector<6x16xf32>
    %11 = arith.addf %5, %10 : vector<6x16xf32>
    %12 = vector.extract_strided_slice %0 {offsets = [0, 2], sizes = [6, 1], strides = [1, 1]} : vector<6x4xf32> to vector<6x1xf32>
    %c2 = arith.constant 2 : index
    %c0_4 = arith.constant 0 : index
    %13 = vector.load %arg1[%c2, %c0_4] : memref<4x16xf32, #tpu.memory_space<vmem>>, vector<1x16xf32>
    %14 = vector.broadcast %12 : vector<6x1xf32> to vector<6x16xf32>
    %15 = vector.broadcast %13 : vector<1x16xf32> to vector<6x16xf32>
    %16 = arith.mulf %14, %15 : vector<6x16xf32>
    %17 = arith.addf %11, %16 : vector<6x16xf32>
    %18 = vector.extract_strided_slice %0 {offsets = [0, 3], sizes = [6, 1], strides = [1, 1]} : vector<6x4xf32> to vector<6x1xf32>
    %c3 = arith.constant 3 : index
    %c0_5 = arith.constant 0 : index
    %19 = vector.load %arg1[%c3, %c0_5] : memref<4x16xf32, #tpu.memory_space<vmem>>, vector<1x16xf32>
    %20 = vector.broadcast %18 : vector<6x1xf32> to vector<6x16xf32>
    %21 = vector.broadcast %19 : vector<1x16xf32> to vector<6x16xf32>
    %22 = arith.mulf %20, %21 : vector<6x16xf32>
    %23 = arith.addf %17, %22 : vector<6x16xf32>
    %c0_6 = arith.constant 0 : index
    %c0_7 = arith.constant 0 : index
    %24 = vector.load %arg3[%c0_6, %c0_7] : memref<6x16xf32, #tpu.memory_space<vmem>>, vector<6x16xf32>
    %25 = arith.mulf %24, %23 : vector<6x16xf32>
    %c0_8 = arith.constant 0 : index
    %c0_9 = arith.constant 0 : index
    %26 = vector.load %arg4[%c0_8, %c0_9] : memref<6x16xf32, #tpu.memory_space<vmem>>, vector<6x16xf32>
    %27 = arith.addf %25, %26 : vector<6x16xf32>
    %c0_10 = arith.constant 0 : index
    %c0_11 = arith.constant 0 : index
    %28 = vector.load %arg5[%c0_10, %c0_11] : memref<6x16xf32, #tpu.memory_space<vmem>>, vector<6x16xf32>
    tpu.vector_store %arg5[%c0_10, %c0_11], %27 {strides = array<i32>} : memref<6x16xf32, #tpu.memory_space<vmem>>, vector<6x16xf32>,
    return
  }
  func.func @transform_0(%arg0: i32) -> (i32, i32) {
    %c0_i32 = arith.constant 0 : i32
    %c0_i32_0 = arith.constant 0 : i32
    return %c0_i32, %arg0 : i32, i32
  }
  func.func @transform_1(%arg0: i32) -> (i32, i32) {
    %c0_i32 = arith.constant 0 : i32
    %c0_i32_0 = arith.constant 0 : i32
    %c0_i32_1 = arith.constant 0 : i32
    return %c0_i32, %c0_i32_0 : i32, i32
  }
  func.func @transform_2(%arg0: i32) -> (i32, i32) {
    %c0_i32 = arith.constant 0 : i32
    %c0_i32_0 = arith.constant 0 : i32
    %c0_i32_1 = arith.constant 0 : i32
    return %c0_i32, %c0_i32_0 : i32, i32
  }
  func.func @transform_3(%arg0: i32) -> (i32, i32) {
    %c0_i32 = arith.constant 0 : i32
    %c0_i32_0 = arith.constant 0 : i32
    %c0_i32_1 = arith.constant 0 : i32
    return %c0_i32, %c0_i32_0 : i32, i32
  }
  func.func @transform_4(%arg0: i32) -> (i32, i32) {
    %c0_i32 = arith.constant 0 : i32
    %c0_i32_0 = arith.constant 0 : i32
    return %c0_i32, %arg0 : i32, i32
  }
}

</mosaic_0001>

<llo_original>
// kernel: tile.9
$region0: #{tile.9}
  %s0 = inlined_call_operand.vmem [shape: f32[2,8,6], index: 0, kind: input, shape index: {}]
  %s1 = inlined_call_operand.vmem [shape: f32[16,6], index: 1, kind: output, shape index: {}]
  $region1: #{tile.9} parent=0
    #allocation0 [shape = 'u8[24576]{0}', space=vmem, size = 0x6000, scoped, tag = 'scoped mem for input reshape']
    %s3 = sshll.u32 1, 2
    %s4 = ssub.s32 %s3, 1
    %s5 = smul.addr 2, 5
    %s6 = scalar_lea.vmem %s0, %s5
    %v7 = vld [vmem:[%s6] sm:%s4]
    %s8 = scalar_lea.vmem [#allocation0], 40
    %9 = vst [vmem:[%s8] sm:%s4] %v7
    %s10 = smul.addr 2, 4
    %s11 = scalar_lea.vmem %s0, %s10
    %v12 = vld [vmem:[%s11] sm:%s4]
    %s13 = scalar_lea.vmem [#allocation0], 32
    %14 = vst [vmem:[%s13] sm:%s4] %v12
    %s15 = smul.addr 2, 3
    %s16 = scalar_lea.vmem %s0, %s15
    %v17 = vld [vmem:[%s16] sm:%s4]
    %s18 = scalar_lea.vmem [#allocation0], 24
    %19 = vst [vmem:[%s18] sm:%s4] %v17
    %s20 = smul.addr 2, 2
    %s21 = scalar_lea.vmem %s0, %s20
    %v22 = vld [vmem:[%s21] sm:%s4]
    %s23 = scalar_lea.vmem [#allocation0], 16
    %24 = vst [vmem:[%s23] sm:%s4] %v22
    %s25 = scalar_lea.vmem %s0, 2
    %v26 = vld [vmem:[%s25] sm:%s4]
    %s27 = scalar_lea.vmem [#allocation0], 8
    %28 = vst [vmem:[%s27] sm:%s4] %v26
    %v29 = vld [vmem:[%s0] sm:%s4]
    %30 = vst [vmem:[#allocation0] sm:%s4] %v29
    %v31 = vld [vmem:[#allocation0] ss:$8 sm:$0xf]
    %s32 = smov 48
    %v33 = vld [vmem:[#allocation0] ss:$8 sm:%s32]
    %vm34 = vcmask 1045508
    %v35 = vsel %vm34, %v33, %v31
    %vm36 = vcmask 64512
    %37 = vst.msk [vmem:[%s1] sm:$0x3f] %vm36, %v35
    %s38 = scalar_lea.vmem [#allocation0], 1
    %v39 = vld [vmem:[%s38] ss:$8 sm:$0xf]
    %s40 = scalar_lea.vmem [#allocation0], 1
    %s41 = smov 48
    %v42 = vld [vmem:[%s40] ss:$8 sm:%s41]
    %vm43 = vcmask 1045508
    %v44 = vsel %vm43, %v42, %v39
    %45 = vrot.lane.b32.xlu0 %v44, 8
    %v46 = vpop.permute.xlu0 %45
    %vm47 = vcmask 130112
    %48 = vst.msk [vmem:[%s1] sm:$0x3f] %vm47, %v46

// kernel: modulation_forward.1
$region0: #{modulation_forward.1}
  #allocation0 [shape = 'u32[]', space=smem, size = 0x4, offset = 0x4, fixed_abs, tag = 'smem constant byte address 0x4 - core index']
  #allocation1 [shape = 'u32[144,128]{1,0:T(1,128)}', space=vmem, size = 0x12000, scoped, tag = 'internal scratch']
  %s0 = inlined_call_operand.vmem [shape: f32[4,16], index: 0, kind: input, shape index: {}]
  %s1 = inlined_call_operand.vmem [shape: f32[6,4], index: 1, kind: input, shape index: {}]
  %s2 = inlined_call_operand.vmem [shape: f32[6,16], index: 2, kind: input, shape index: {}]
  %s3 = inlined_call_operand.vmem [shape: f32[6,16], index: 3, kind: input, shape index: {}]
  %s4 = inlined_call_operand.vmem [shape: f32[6,16], index: 4, kind: output, shape index: {}]
  %s5 = sld [smem:[#allocation0]]
  $region26: #{modulation_forward.1} parent=0
    _
  %s7 = ssub.s32 1, %s5
  %s8 = scalar_select 0, %s7, %s5
  // Predicated region
  $region2: #{modulation_forward.1} parent=0 // pred_check
    _
  $region3: #{modulation_forward.1} parent=0 // pred_check_branch
    %10 = sbr.rel (0) target = $region5
  $region4: #{modulation_forward.1} parent=0 // pred_region
    _
  $region5: #{modulation_forward.1} parent=0 // pred_fallthru
    _
  // Predicated region
  $region6: #{modulation_forward.1} parent=0 // pred_check
    _
  $region7: #{modulation_forward.1} parent=0 // pred_check_branch
    %12 = sbr.rel (0) target = $region9
  $region8: #{modulation_forward.1} parent=0 // pred_region
    _
  $region9: #{modulation_forward.1} parent=0 // pred_fallthru
    _
  // Predicated region
  $region10: #{modulation_forward.1} parent=0 // pred_check
    _
  $region11: #{modulation_forward.1} parent=0 // pred_check_branch
    %14 = sbr.rel (0) target = $region13
  $region12: #{modulation_forward.1} parent=0 // pred_region
    _
  $region13: #{modulation_forward.1} parent=0 // pred_fallthru
    _
  // Predicated region
  $region14: #{modulation_forward.1} parent=0 // pred_check
    _
  $region15: #{modulation_forward.1} parent=0 // pred_check_branch
    %16 = sbr.rel (0) target = $region17
  $region16: #{modulation_forward.1} parent=0 // pred_region
    _
  $region17: #{modulation_forward.1} parent=0 // pred_fallthru
    _
  %v17 = vld [vmem:[%s1] sm:$0x3f]
  %v18 = vld [vmem:[%s0] sm:$0x1]
  %20 = vset.pattern.permute.xlu0 0
  %21 = vperm.xlu0 %20, %v17
  %v22 = vpop.permute.xlu0 %21
  %v24 = vlaneseq
  %v25 = vshrl.u32 %v24, 7
  %v26 = vsub.s32 0, %v25
  %v27 = vrot.slane %v18, %v26
  %v28 = vmul.f32 %v22, %v27
  %v29 = vld [vmem:[%s0 + $0x1] sm:$0x1]
  %30 = vset.pattern.permute.xlu0 1
  %31 = vperm.xlu0 %30, %v17
  %v32 = vpop.permute.xlu0 %31
  %v34 = vlaneseq
  %v35 = vshrl.u32 %v34, 7
  %v36 = vsub.s32 0, %v35
  %v37 = vrot.slane %v29, %v36
  %v38 = vmul.f32 %v32, %v37
  %v39 = vadd.f32 %v28, %v38
  %v40 = vld [vmem:[%s0 + $0x2] sm:$0x1]
  %41 = vset.pattern.permute.xlu0 2
  %42 = vperm.xlu0 %41, %v17
  %v43 = vpop.permute.xlu0 %42
  %v45 = vlaneseq
  %v46 = vshrl.u32 %v45, 7
  %v47 = vsub.s32 0, %v46
  %v48 = vrot.slane %v40, %v47
  %v49 = vmul.f32 %v43, %v48
  %v50 = vadd.f32 %v39, %v49
  %v51 = vld [vmem:[%s0 + $0x3] sm:$0x1]
  %52 = vset.pattern.permute.xlu0 3
  %53 = vperm.xlu0 %52, %v17
  %v54 = vpop.permute.xlu0 %53
  %v56 = vlaneseq
  %v57 = vshrl.u32 %v56, 7
  %v58 = vsub.s32 0, %v57
  %v59 = vrot.slane %v51, %v58
  %v60 = vmul.f32 %v54, %v59
  %v61 = vadd.f32 %v50, %v60
  %v62 = vld [vmem:[%s2] sm:$0x3f]
  %v63 = vmul.f32 %v62, %v61
  %v64 = vld [vmem:[%s3] sm:$0x3f]
  %v65 = vadd.f32 %v63, %v64
  %vm66 = vcmask 128000
  %67 = vst.msk [vmem:[%s4] sm:$0x3f] %vm66, %v65
  // Predicated region
  $region18: #{modulation_forward.1} parent=0 // pred_check
    _
  $region19: #{modulation_forward.1} parent=0 // pred_check_branch
    %69 = sbr.rel (0) target = $region21
  $region20: #{modulation_forward.1} parent=0 // pred_region
    _
  $region21: #{modulation_forward.1} parent=0 // pred_fallthru
    _
  // Predicated region
  $region22: #{modulation_forward.1} parent=0 // pred_check
    _
  $region23: #{modulation_forward.1} parent=0 // pred_check_branch
    %71 = sbr.rel (0) target = $region25
  $region24: #{modulation_forward.1} parent=0 // pred_region
    _
  $region25: #{modulation_forward.1} parent=0 // pred_fallthru
    _

</llo_original>
